<compile_context>
chip_gen: v7x
topology: tpu7x:2x2x1
jax: 0.10.0
libtpu: 0.0.40
codegen_flags: <defaults>
</compile_context>

<pallas_src>
import functools

import jax
import jax.numpy as jnp
from jax.experimental import pallas as pl
from jax.experimental.pallas import tpu as pltpu


def _channel_attention_kernel(x_ref, w1t_ref, w2t_ref, o_ref):
    """x_ref:(tb,C)  w1t_ref:(C,Hp)  w2t_ref:(Hp,C)  o_ref:(tb,C)."""
    x = x_ref[...]                                              # (tb, C)

    # avg_pool and max_pool on a (B, C, 1, 1) tensor are identity, so
    # avg_out + max_out == 2 * fc2(relu(fc1(x)))  (exactly).
    h = jnp.maximum(
        jnp.dot(x, w1t_ref[...], preferred_element_type=jnp.float32), 0.0)
    o = jnp.dot(h.astype(w2t_ref.dtype), w2t_ref[...],
                preferred_element_type=jnp.float32)             # (tb, C) f32

    o_ref[...] = jax.nn.sigmoid(2.0 * o).astype(o_ref.dtype)


def prepare_channel_attention_weights(w_fc1, w_fc2, param_dtype=None):
    """One-time parameter prep (do NOT call per forward).

    w_fc1: (H, C) fc1 = Conv2d(C, H, 1, bias=False) weight, squeezed.
    w_fc2: (C, H) fc2 = Conv2d(H, C, 1, bias=False) weight, squeezed.
    Returns (w1t:(C,Hp), w2t:(Hp,C)) pre-transposed, with the hidden dim
    zero-padded to a multiple of 128 lanes (exact: relu(0)=0 and the padded
    fc2 rows are zero, so the output is unchanged).
    """
    H, C = w_fc1.shape
    assert w_fc2.shape == (C, H)
    if param_dtype is None:
        param_dtype = jnp.asarray(w_fc1).dtype
    hp = max(128, ((H + 127) // 128) * 128)
    w1t = jnp.zeros((C, hp), param_dtype).at[:, :H].set(
        jnp.asarray(w_fc1, param_dtype).T)
    w2t = jnp.zeros((hp, C), param_dtype).at[:H, :].set(
        jnp.asarray(w_fc2, param_dtype).T)
    return w1t, w2t


@functools.partial(jax.jit, static_argnames=("block_b",))
def channel_attention(x, w1t, w2t, *, block_b=None):
    """Pallas ChannelAttention forward.

    x:   (B, C) or (B, C, 1, 1) input (the module's view() requires exactly
         B*C elements, i.e. a 1x1 spatial map).
    w1t: (C, Hp)  pre-transposed / padded fc1 weight (prepare_* above).
    w2t: (Hp, C)  pre-transposed / padded fc2 weight.
    Returns (B, C, 1, 1) sigmoid attention, matching the nn.Module output.
    """
    B = x.shape[0]
    C = x.shape[1]
    x2 = x.reshape(B, C)                      # identity view, pure glue
    assert w1t.shape[0] == C and w2t.shape[1] == C

    # Batch tiling: single block at small B; 512-row (mult of 8) tiles for
    # large B so the pipeline double-buffers and v7x megacore can shard.
    # Tiles stay well under the v7x 64 MiB / 32 MiB-scoped VMEM budget.
    if block_b is None:
        block_b = B if B <= 512 else 512
    block_b = min(block_b, B)
    n_blocks = -(-B // block_b)
    bp = n_blocks * block_b
    if bp != B:
        x2 = jnp.pad(x2, ((0, bp - B), (0, 0)))

    hp = w1t.shape[1]
    out = pl.pallas_call(
        _channel_attention_kernel,
        out_shape=jax.ShapeDtypeStruct((bp, C), x.dtype),
        grid_spec=pltpu.PrefetchScalarGridSpec(
            num_scalar_prefetch=0,
            grid=(n_blocks,),
            in_specs=[
                pl.BlockSpec((block_b, C), lambda i: (i, 0)),
                pl.BlockSpec((C, hp), lambda i: (0, 0)),
                pl.BlockSpec((hp, C), lambda i: (0, 0)),
            ],
            out_specs=pl.BlockSpec((block_b, C), lambda i: (i, 0)),
        ),
        compiler_params=pltpu.CompilerParams(
            dimension_semantics=("parallel",)),
    )(x2, w1t, w2t)

    # Restore NCHW (B, C, 1, 1) shape of the PyTorch module output.
    return out[:B].reshape(B, C, 1, 1)


def _reference(x, w_fc1, w_fc2):
    """Pure-JAX reference mirroring the PyTorch forward exactly."""
    B, C = x.shape[0], x.shape[1]
    xv = x.reshape(B, C, 1, 1)
    pooled_avg = jnp.mean(xv, axis=(2, 3))   # (B, C)
    pooled_max = jnp.max(xv, axis=(2, 3))    # (B, C)

    def fc_path(p):
        h = jnp.maximum(p @ w_fc1.T, 0.0)    # (B, H)
        return h @ w_fc2.T                   # (B, C)

    out = fc_path(pooled_avg) + fc_path(pooled_max)
    return jax.nn.sigmoid(out).reshape(B, C, 1, 1)


if __name__ == "__main__":
    key = jax.random.PRNGKey(0)
    k_x, k_w1, k_w2 = jax.random.split(key, 3)

    B = 2
    in_planes = 64
    ratio = 16
    hidden = in_planes // ratio              # 4

    # Input in the NCHW form the module's view() expects (1x1 spatial map).
    x = jax.random.normal(k_x, (B, in_planes, 1, 1), dtype=jnp.float32)

    # Synthetic Conv2d 1x1 (no bias) weights, squeezed to 2D.
    w_fc1 = 0.1 * jax.random.normal(k_w1, (hidden, in_planes), jnp.float32)
    w_fc2 = 0.1 * jax.random.normal(k_w2, (in_planes, hidden), jnp.float32)

    # One-time weight prep (transpose + lane padding), hoisted out of forward.
    w1t, w2t = prepare_channel_attention_weights(w_fc1, w_fc2)

    out = channel_attention(x, w1t, w2t)
    out = jax.block_until_ready(out)

    ref = _reference(x, w_fc1, w_fc2)
    assert out.shape == (B, in_planes, 1, 1)
    assert jnp.allclose(out, ref, atol=1e-5, rtol=1e-5)

    print("KERNEL_OK")
</pallas_src>

<mosaic_0001>
module attributes {stable_mosaic.version = 11 : i64} {
  func.func @_channel_attention_kernel(%arg0: i32, %arg1: memref<2x64xf32, #tpu.memory_space<vmem>>, %arg2: memref<64x128xf32, #tpu.memory_space<vmem>>, %arg3: memref<128x64xf32, #tpu.memory_space<vmem>>, %arg4: memref<2x64xf32, #tpu.memory_space<vmem>>) attributes {dimension_semantics = [#tpu.dimension_semantics<parallel>], iteration_bounds = array<i64: 1>, scalar_prefetch = 0 : i64, scratch_operands = 0 : i64, tpu.core_type = #tpu.core_type<tc>, window_params = [{transform_indices = @transform_0, window_bounds = array<i64: 2, 64>}, {pipeline_mode = #tpu.pipeline_mode<synchronous>, transform_indices = @transform_1, window_bounds = array<i64: 64, 128>}, {pipeline_mode = #tpu.pipeline_mode<synchronous>, transform_indices = @transform_2, window_bounds = array<i64: 128, 64>}, {transform_indices = @transform_3, window_bounds = array<i64: 2, 64>}]} {
    %c0 = arith.constant 0 : index
    %c0_0 = arith.constant 0 : index
    %0 = vector.load %arg1[%c0, %c0_0] : memref<2x64xf32, #tpu.memory_space<vmem>>, vector<2x64xf32>
    %c0_1 = arith.constant 0 : index
    %c0_2 = arith.constant 0 : index
    %1 = vector.load %arg2[%c0_1, %c0_2] : memref<64x128xf32, #tpu.memory_space<vmem>>, vector<64x128xf32>
    %cst = arith.constant dense<0.000000e+00> : vector<2x128xf32>
    %2 = tpu.matmul %0, %1, %cst {dimension_numbers = #tpu.dot_dimension_numbers<[1], [0], [0], [1], [0, 0, 1, 1], [], []>} : vector<2x64xf32>, vector<64x128xf32>, vector<2x128xf32> -> vector<2x128xf32>
    %cst_3 = arith.constant 0.000000e+00 : f32
    %3 = vector.broadcast %cst_3 : f32 to vector<2x128xf32>
    %4 = arith.maximumf %2, %3 : vector<2x128xf32>
    %c0_4 = arith.constant 0 : index
    %c0_5 = arith.constant 0 : index
    %5 = vector.load %arg3[%c0_4, %c0_5] : memref<128x64xf32, #tpu.memory_space<vmem>>, vector<128x64xf32>
    %cst_6 = arith.constant dense<0.000000e+00> : vector<2x64xf32>
    %6 = tpu.matmul %4, %5, %cst_6 {dimension_numbers = #tpu.dot_dimension_numbers<[1], [0], [0], [1], [0, 0, 1, 1], [], []>} : vector<2x128xf32>, vector<128x64xf32>, vector<2x64xf32> -> vector<2x64xf32>
    %cst_7 = arith.constant 2.000000e+00 : f32
    %7 = vector.broadcast %cst_7 : f32 to vector<2x64xf32>
    %8 = arith.mulf %7, %6 : vector<2x64xf32>
    %9 = arith.negf %8 : vector<2x64xf32>
    %10 = math.exp %9 : vector<2x64xf32>
    %cst_8 = arith.constant 1.000000e+00 : f32
    %11 = vector.broadcast %cst_8 : f32 to vector<2x64xf32>
    %12 = arith.addf %11, %10 : vector<2x64xf32>
    %13 = arith.divf %11, %12 : vector<2x64xf32>
    %c0_9 = arith.constant 0 : index
    %c0_10 = arith.constant 0 : index
    %14 = vector.load %arg4[%c0_9, %c0_10] : memref<2x64xf32, #tpu.memory_space<vmem>>, vector<2x64xf32>
    tpu.vector_store %arg4[%c0_9, %c0_10], %13 {strides = array<i32>} : memref<2x64xf32, #tpu.memory_space<vmem>>, vector<2x64xf32>,
    return
  }
  func.func @transform_0(%arg0: i32) -> (i32, i32) {
    %c0_i32 = arith.constant 0 : i32
    %c0_i32_0 = arith.constant 0 : i32
    return %arg0, %c0_i32 : i32, i32
  }
  func.func @transform_1(%arg0: i32) -> (i32, i32) {
    %c0_i32 = arith.constant 0 : i32
    %c0_i32_0 = arith.constant 0 : i32
    %c0_i32_1 = arith.constant 0 : i32
    return %c0_i32, %c0_i32_0 : i32, i32
  }
  func.func @transform_2(%arg0: i32) -> (i32, i32) {
    %c0_i32 = arith.constant 0 : i32
    %c0_i32_0 = arith.constant 0 : i32
    %c0_i32_1 = arith.constant 0 : i32
    return %c0_i32, %c0_i32_0 : i32, i32
  }
  func.func @transform_3(%arg0: i32) -> (i32, i32) {
    %c0_i32 = arith.constant 0 : i32
    %c0_i32_0 = arith.constant 0 : i32
    return %arg0, %c0_i32 : i32, i32
  }
}

</mosaic_0001>

<llo_original>
// kernel: channel_attention.1
$region0: #{channel_attention.1}
  #allocation0 [shape = 'u32[]', space=smem, size = 0x4, offset = 0x4, fixed_abs, tag = 'smem constant byte address 0x4 - core index']
  #allocation1 [shape = 'u32[144,128]{1,0:T(1,128)}', space=vmem, size = 0x12000, scoped, tag = 'internal scratch']
  %s0 = inlined_call_operand.vmem [shape: f32[2,64], index: 0, kind: input, shape index: {}]
  %s1 = inlined_call_operand.vmem [shape: f32[64,128], index: 1, kind: input, shape index: {}]
  %s2 = inlined_call_operand.vmem [shape: f32[128,64], index: 2, kind: input, shape index: {}]
  %s3 = inlined_call_operand.hbm [shape: f32[2,64], index: 3, kind: output, shape index: {}]
  %s4 = sld [smem:[#allocation0]]
  $region22: #{channel_attention.1} parent=0
    _
  %s6 = ssub.s32 1, %s4
  %s7 = scalar_select 0, %s6, %s4
  $region1: #{channel_attention.1} parent=0
    #allocation2 [shape = 'u8[1024]{0}', space=vmem, size = 0x400, scoped, tag = 'output window, operand 0, single buffered']
    #allocation3 [shape = 's32[1]{0}', space=sflag, size = 0x4, scoped, tag = 'scoped memory for channel_attention.1']
    %8 = vsyncpa [#allocation3], 0
    // Predicated region
    $region2: #{channel_attention.1} parent=1 // pred_check
      _
    $region3: #{channel_attention.1} parent=1 // pred_check_branch
      %10 = sbr.rel (0) target = $region5
    $region4: #{channel_attention.1} parent=1 // pred_region
      _
    $region5: #{channel_attention.1} parent=1 // pred_fallthru
      _
    // Predicated region
    $region6: #{channel_attention.1} parent=1 // pred_check
      _
    $region7: #{channel_attention.1} parent=1 // pred_check_branch
      %12 = sbr.rel (0) target = $region9
    $region8: #{channel_attention.1} parent=1 // pred_region
      _
    $region9: #{channel_attention.1} parent=1 // pred_fallthru
      _
    // Predicated region
    $region10: #{channel_attention.1} parent=1 // pred_check
      _
    $region11: #{channel_attention.1} parent=1 // pred_check_branch
      %14 = sbr.rel (0) target = $region13
    $region12: #{channel_attention.1} parent=1 // pred_region
      _
    $region13: #{channel_attention.1} parent=1 // pred_fallthru
      _
    %v15 = vld [vmem:[%s0] sm:$0x3]
    %v16 = vld [vmem:[%s1] sm:$0xff]
    %v17 = vld [vmem:[%s1 + $0x8] sm:$0xff]
    %v18 = vld [vmem:[%s1 + $0x10] sm:$0xff]
    %v19 = vld [vmem:[%s1 + $0x18] sm:$0xff]
    %v20 = vld [vmem:[%s1 + $0x20] sm:$0xff]
    %v21 = vld [vmem:[%s1 + $0x28] sm:$0xff]
    %v22 = vld [vmem:[%s1 + $0x30] sm:$0xff]
    %v23 = vld [vmem:[%s1 + $0x38] sm:$0xff]
    %vm24 = vcmask 523264
    %v26 = vsel %vm24, %v15, 0
    %28 = vmatprep.subr.mxu0 0.0
    %29 = vmatpush1.msra.mxu0 %v16
    %30 = vmatprep.subr.mxu0 0.0
    %31 = vmatpush1.msra.mxu0 %v17
    %32 = vmatprep.subr.mxu0 0.0
    %33 = vmatpush1.msra.mxu0 %v18
    %34 = vmatprep.subr.mxu0 0.0
    %35 = vmatpush1.msra.mxu0 %v19
    %36 = vmatprep.subr.mxu0 0.0
    %37 = vmatpush1.msra.mxu0 %v20
    %38 = vmatprep.subr.mxu0 0.0
    %39 = vmatpush1.msra.mxu0 %v21
    %40 = vmatprep.subr.mxu0 0.0
    %41 = vmatpush1.msra.mxu0 %v22
    %42 = vmatprep.subr.mxu0 0.0
    %43 = vmatpush1.msra.mxu0 %v23
    %44 = vmatprep.subr.mxu0 0.0
    %45 = vmatpush1.msra.mxu0 0.0
    %46 = vmatprep.subr.mxu0 0.0
    %47 = vmatpush1.msra.mxu0 0.0
    %48 = vmatprep.subr.mxu0 0.0
    %49 = vmatpush1.msra.mxu0 0.0
    %50 = vmatprep.subr.mxu0 0.0
    %51 = vmatpush1.msra.mxu0 0.0
    %52 = vmatprep.subr.mxu0 0.0
    %53 = vmatpush1.msra.mxu0 0.0
    %54 = vmatprep.subr.mxu0 0.0
    %55 = vmatpush1.msra.mxu0 0.0
    %56 = vmatprep.subr.mxu0 0.0
    %57 = vmatpush1.msra.mxu0 0.0
    %58 = vmatprep.subr.mxu0 0.0
    %59 = vmatpush1.msra.mxu0 0.0
    %60 = vmatprep.subr.mxu0 0.0
    %61 = vmatpush1.msra.mxu0 0.0
    %62 = vmatprep.subr.mxu0 0.0
    %63 = vmatpush1.msra.mxu0 0.0
    %64 = vmatprep.subr.mxu0 0.0
    %65 = vmatpush1.msra.mxu0 0.0
    %66 = vmatprep.subr.mxu0 0.0
    %67 = vmatpush1.msra.mxu0 0.0
    %68 = vmatprep.subr.mxu0 0.0
    %69 = vmatpush1.msra.mxu0 0.0
    %70 = vmatprep.subr.mxu0 0.0
    %71 = vmatpush1.msra.mxu0 0.0
    %72 = vmatprep.subr.mxu0 0.0
    %73 = vmatpush1.msra.mxu0 0.0
    %74 = vmatprep.subr.mxu0 0.0
    %75 = vmatpush1.msra.mxu0 0.0
    %76 = vmatprep.subr.mxu0 0.0
    %77 = vmatpush1.msra.mxu0 0.0
    %78 = vmatprep.subr.mxu0 0.0
    %79 = vmatpush1.msra.mxu0 0.0
    %80 = vmatprep.subr.mxu0 0.0
    %81 = vmatpush1.msra.mxu0 0.0
    %82 = vmatprep.subr.mxu0 0.0
    %83 = vmatpush1.msra.mxu0 0.0
    %84 = vmatprep.subr.mxu0 0.0
    %85 = vmatpush1.msra.mxu0 0.0
    %86 = vmatprep.subr.mxu0 0.0
    %87 = vmatpush1.msra.mxu0 0.0
    %88 = vmatprep.subr.mxu0 0.0
    %89 = vmatpush1.msra.mxu0 0.0
    %90 = vmatprep.subr.mxu0 0.0
    %91 = vmatpush1.msra.mxu0 0.0
    %92 = vmatprep.mubr.f32.mxu0 0.0
    %93 = vmatmul.mubr.f32.gmra.mrb[0].mxu0 %v26
    %v94 = vpop.f32.mrb[0].mxu0
    %v95 = vadd.f32 0.0, %v94
    %v96 = vpop.f32.mrb[0].mxu0
    %97 = vdwg.mxu0
    %v98 = vmax.f32 %v95, 0.0
    %v99 = vld [vmem:[%s2] sm:$0xff]
    %v100 = vld [vmem:[%s2 + $0x8] sm:$0xff]
    %v101 = vld [vmem:[%s2 + $0x10] sm:$0xff]
    %v102 = vld [vmem:[%s2 + $0x18] sm:$0xff]
    %v103 = vld [vmem:[%s2 + $0x20] sm:$0xff]
    %v104 = vld [vmem:[%s2 + $0x28] sm:$0xff]
    %v105 = vld [vmem:[%s2 + $0x30] sm:$0xff]
    %v106 = vld [vmem:[%s2 + $0x38] sm:$0xff]
    %v107 = vld [vmem:[%s2 + $0x40] sm:$0xff]
    %v108 = vld [vmem:[%s2 + $0x48] sm:$0xff]
    %v109 = vld [vmem:[%s2 + $0x50] sm:$0xff]
    %v110 = vld [vmem:[%s2 + $0x58] sm:$0xff]
    %v111 = vld [vmem:[%s2 + $0x60] sm:$0xff]
    %v112 = vld [vmem:[%s2 + $0x68] sm:$0xff]
    %v113 = vld [vmem:[%s2 + $0x70] sm:$0xff]
    %v114 = vld [vmem:[%s2 + $0x78] sm:$0xff]
    %115 = vmatprep.subr.mxu0 0.0
    %116 = vmatpush1.msra.mxu0 %v99
    %117 = vmatprep.subr.mxu0 0.0
    %118 = vmatpush1.msra.mxu0 %v100
    %119 = vmatprep.subr.mxu0 0.0
    %120 = vmatpush1.msra.mxu0 %v101
    %121 = vmatprep.subr.mxu0 0.0
    %122 = vmatpush1.msra.mxu0 %v102
    %123 = vmatprep.subr.mxu0 0.0
    %124 = vmatpush1.msra.mxu0 %v103
    %125 = vmatprep.subr.mxu0 0.0
    %126 = vmatpush1.msra.mxu0 %v104
    %127 = vmatprep.subr.mxu0 0.0
    %128 = vmatpush1.msra.mxu0 %v105
    %129 = vmatprep.subr.mxu0 0.0
    %130 = vmatpush1.msra.mxu0 %v106
    %131 = vmatprep.subr.mxu0 0.0
    %132 = vmatpush1.msra.mxu0 %v107
    %133 = vmatprep.subr.mxu0 0.0
    %134 = vmatpush1.msra.mxu0 %v108
    %135 = vmatprep.subr.mxu0 0.0
    %136 = vmatpush1.msra.mxu0 %v109
    %137 = vmatprep.subr.mxu0 0.0
    %138 = vmatpush1.msra.mxu0 %v110
    %139 = vmatprep.subr.mxu0 0.0
    %140 = vmatpush1.msra.mxu0 %v111
    %141 = vmatprep.subr.mxu0 0.0
    %142 = vmatpush1.msra.mxu0 %v112
    %143 = vmatprep.subr.mxu0 0.0
    %144 = vmatpush1.msra.mxu0 %v113
    %145 = vmatprep.subr.mxu0 0.0
    %146 = vmatpush1.msra.mxu0 %v114
    %147 = vmatprep.subr.mxu0 0.0
    %148 = vmatpush1.msra.mxu0 0.0
    %149 = vmatprep.subr.mxu0 0.0
    %150 = vmatpush1.msra.mxu0 0.0
    %151 = vmatprep.subr.mxu0 0.0
    %152 = vmatpush1.msra.mxu0 0.0
    %153 = vmatprep.subr.mxu0 0.0
    %154 = vmatpush1.msra.mxu0 0.0
    %155 = vmatprep.subr.mxu0 0.0
    %156 = vmatpush1.msra.mxu0 0.0
    %157 = vmatprep.subr.mxu0 0.0
    %158 = vmatpush1.msra.mxu0 0.0
    %159 = vmatprep.subr.mxu0 0.0
    %160 = vmatpush1.msra.mxu0 0.0
    %161 = vmatprep.subr.mxu0 0.0
    %162 = vmatpush1.msra.mxu0 0.0
    %163 = vmatprep.subr.mxu0 0.0
    %164 = vmatpush1.msra.mxu0 0.0
    %165 = vmatprep.subr.mxu0 0.0
    %166 = vmatpush1.msra.mxu0 0.0
    %167 = vmatprep.subr.mxu0 0.0
    %168 = vmatpush1.msra.mxu0 0.0
    %169 = vmatprep.subr.mxu0 0.0
    %170 = vmatpush1.msra.mxu0 0.0
    %171 = vmatprep.subr.mxu0 0.0
    %172 = vmatpush1.msra.mxu0 0.0
    %173 = vmatprep.subr.mxu0 0.0
    %174 = vmatpush1.msra.mxu0 0.0
    %175 = vmatprep.subr.mxu0 0.0
    %176 = vmatpush1.msra.mxu0 0.0
    %177 = vmatprep.subr.mxu0 0.0
    %178 = vmatpush1.msra.mxu0 0.0
    %179 = vmatprep.mubr.f32.mxu0 0.0
    %180 = vmatmul.mubr.f32.gmra.mrb[0].mxu0 %v98
    %v181 = vpop.f32.mrb[0].mxu0
    %v182 = vadd.f32 0.0, %v181
    %v183 = vpop.f32.mrb[0].mxu0
    %184 = vdwg.mxu0
    %v185 = vmul.f32 %v182, 2.0
    %v186 = vxor.u32 %v185, 2147483648
    %v187 = vmul.f32 %v186, 1.442695
    %v188 = vpow.pop %v187
    %v189 = vadd.f32 %v188, 1.0
    %v190 = vrcp.pop %v189
    %v191 = vmul.f32 1.0, %v190
    %vm192 = vcmask 517120
    %193 = vst.msk [vmem:[#allocation2] sm:$0x3] %vm192, %v191
    // Predicated region
    $region14: #{channel_attention.1} parent=1 // pred_check
      _
    $region15: #{channel_attention.1} parent=1 // pred_check_branch
      %195 = sbr.rel (0) target = $region17
    $region16: #{channel_attention.1} parent=1 // pred_region
      %s197 = ssub.s32 32, 32
      %198 = vsyncadd [#allocation3], %s197
      %s200 = sshll.u32 [#allocation2], 4
      %s201 = int_to_ptr.vmem [resolvable:$true] %s200
      %203 = dma.vmem_to_hbm [thread:$0]  %s201, 32, %s3, [#allocation3]
    $region17: #{channel_attention.1} parent=1 // pred_fallthru
      _
    // Predicated region
    $region18: #{channel_attention.1} parent=1 // pred_check
      _
    $region19: #{channel_attention.1} parent=1 // pred_check_branch
      %205 = sbr.rel (0) target = $region21
    $region20: #{channel_attention.1} parent=1 // pred_region
      %206 = dma.done [#allocation3], 32
    $region21: #{channel_attention.1} parent=1 // pred_fallthru
      _
    %207 = vsyncpa [#allocation3], 1

</llo_original>
